<compile_context>
chip_gen: v7x
topology: tpu7x:2x2x1
jax: 0.10.0
libtpu: 0.0.40
codegen_flags: <defaults>
</compile_context>

<pallas_src>
import functools

import jax
import jax.numpy as jnp
from jax.experimental import pallas as pl
from jax.experimental.pallas import tpu as pltpu


def _attention_kernel(enc_ref, wah_ref, uw_ref, ub_ref, aw_ref, out_ref,
                      *, n_valid):
    # enc_ref: (BT, N8, E) bf16    wah_ref: (BT, 1, A) f32
    # uw_ref : (E, A)     bf16     ub_ref/aw_ref: (1, A) f32
    # out_ref: (BT, 1, Nout) f32
    bt, n8, e = enc_ref.shape
    a = uw_ref.shape[1]
    nout = out_ref.shape[-1]

    # Single bf16 MXU pass over the whole batch tile: (BT*N8, E) @ (E, A),
    # f32 accumulate.  N8 % 8 == 0 keeps both reshapes layout-free.
    enc2d = enc_ref[...].reshape(bt * n8, e)
    u_hs = jnp.dot(enc2d, uw_ref[...], preferred_element_type=jnp.float32)
    u_hs = (u_hs + ub_ref[...]).reshape(bt, n8, a)

    # Add the precomputed hidden projection (broadcast over N), tanh on EUP.
    combined = jnp.tanh(u_hs + wah_ref[...])                 # (BT, N8, A) f32

    # Final A projection as VPU multiply + lane reduce (its output is 1 lane
    # wide, so an MXU pass would be wasted).  A_b is dropped: softmax is
    # shift-invariant, so the scalar bias cannot change the output.
    scores = jnp.sum(combined * aw_ref[...], axis=-1)        # (BT, N8)

    # Widen to the lane-dense output width and mask padded locations.
    if nout > n8:
        scores = jnp.concatenate(
            [scores, jnp.zeros((bt, nout - n8), jnp.float32)], axis=-1)
    if n_valid < nout:
        lane = jax.lax.broadcasted_iota(jnp.int32, (bt, nout), 1)
        scores = jnp.where(lane < n_valid, scores, -1e30)

    # Numerically-stable softmax over the encoder locations (lane axis).
    m = jnp.max(scores, axis=-1, keepdims=True)
    exp_s = jnp.exp(scores - m)
    denom = jnp.sum(exp_s, axis=-1, keepdims=True)
    probs = exp_s * pl.reciprocal(denom, approx=True)        # EUP divide
    out_ref[...] = probs[:, None, :].astype(out_ref.dtype)


def attention_forward(encoder_outputs, hidden, params, *, block_b=None):
    """encoder_outputs: (B, N, E), hidden: (B, D) -> (B, N) softmax weights."""
    B, N, E = encoder_outputs.shape
    A = params["U_w"].shape[1]

    # Hidden projection hoisted out of the kernel: it is tiny and badly
    # shaped for the per-tile MXU; computing it once here frees W_w's VMEM.
    w_ah = (jnp.dot(hidden, params["W_w"],
                    precision=jax.lax.Precision.HIGHEST,
                    preferred_element_type=jnp.float32)
            + params["W_b"]).astype(jnp.float32)              # (B, A)

    # Pad N to a sublane multiple (layout-free reshapes in the kernel) and
    # pick a lane-dense (128-multiple) output width.
    n8 = ((N + 7) // 8) * 8
    nout = ((N + 127) // 128) * 128

    # Batch tile: target ~512 rows (BT*N8) per MXU pass, cap the double-
    # buffered bf16 enc tile at ~8 MiB, and keep >=2 grid steps when B > 1
    # so both v7x TensorCores get work under dimension_semantics="parallel".
    if block_b is None:
        block_b = max(1, min(B, pl.cdiv(512, n8)))
        while block_b > 1 and 2 * block_b * n8 * E * 2 > 8 * 2**20:
            block_b = max(1, block_b // 2)
        if B > 1:
            block_b = min(block_b, pl.cdiv(B, 2))
    block_b = max(1, min(block_b, B))

    Bp = pl.cdiv(B, block_b) * block_b
    enc = encoder_outputs.astype(jnp.bfloat16)                # halve HBM stream
    enc = jnp.pad(enc, ((0, Bp - B), (0, n8 - N), (0, 0)))
    w_ah = jnp.pad(w_ah, ((0, Bp - B), (0, 0)))[:, None, :]   # (Bp, 1, A)

    u_w = params["U_w"].astype(jnp.bfloat16)                  # (E, A)
    u_b = params["U_b"].reshape(1, A).astype(jnp.float32)
    a_w_row = params["A_w"].reshape(1, A).astype(jnp.float32)

    # Explicit scoped-VMEM budget from the actual tile footprint
    # (double-buffered I/O tiles + resident weights + f32 intermediates),
    # clamped to the smallest physical VMEM (v7x: 64 MiB).
    tile_io = (block_b * n8 * E * 2        # enc tile (bf16)
               + block_b * A * 4           # w_ah tile
               + block_b * nout * 4)       # out tile
    weights = E * A * 2 + 2 * A * 4
    interm = 3 * block_b * n8 * A * 4
    vmem_limit = int(min(64 * 2**20,
                         max(16 * 2**20, 2 * (2 * tile_io + 2 * weights + interm))))

    kernel = functools.partial(_attention_kernel, n_valid=N)

    # TODO(synk): for very large N, add an "arbitrary" N grid axis with an
    # online softmax instead of loading the full (BT, N, E) slab per step.
    out = pl.pallas_call(
        kernel,
        out_shape=jax.ShapeDtypeStruct((Bp, 1, nout), jnp.float32),
        grid_spec=pltpu.PrefetchScalarGridSpec(
            num_scalar_prefetch=0,
            grid=(Bp // block_b,),
            in_specs=[
                pl.BlockSpec((block_b, n8, E), lambda b: (b, 0, 0)),  # enc (bf16)
                pl.BlockSpec((block_b, 1, A), lambda b: (b, 0, 0)),   # w_ah
                pl.BlockSpec((E, A), lambda b: (0, 0)),   # U weight (VMEM-resident)
                pl.BlockSpec((1, A), lambda b: (0, 0)),   # U bias
                pl.BlockSpec((1, A), lambda b: (0, 0)),   # A weight row
            ],
            out_specs=pl.BlockSpec((block_b, 1, nout), lambda b: (b, 0, 0)),
        ),
        compiler_params=pltpu.CompilerParams(
            dimension_semantics=("parallel",),
            vmem_limit_bytes=vmem_limit),
    )(enc, w_ah, u_w, u_b, a_w_row)

    return out[:B, 0, :N]                                     # (B, N)


def _reference(encoder_outputs, hidden, params):
    hp = jax.lax.Precision.HIGHEST
    u_hs = jnp.einsum("bne,ea->bna", encoder_outputs, params["U_w"],
                      precision=hp) + params["U_b"]
    w_ah = jnp.einsum("bd,da->ba", hidden, params["W_w"],
                      precision=hp) + params["W_b"]
    combined = jnp.tanh(u_hs + w_ah[:, None, :])
    scores = jnp.einsum("bna,ax->bnx", combined, params["A_w"],
                        precision=hp)[..., 0] + params["A_b"][0, 0]
    return jax.nn.softmax(scores, axis=1)


if __name__ == "__main__":
    # Small shapes consistent with the module's forward
    # (real module uses encoder_dim=2048, decoder_dim=512, attention_dim=512).
    B, N = 4, 32                # batch, number of encoder locations
    encoder_dim = 256
    decoder_dim = 128
    attention_dim = 128

    key = jax.random.PRNGKey(0)
    k_enc, k_hid, k_uw, k_ub, k_ww, k_wb, k_aw, k_ab = jax.random.split(key, 8)

    encoder_outputs = jax.random.normal(k_enc, (B, N, encoder_dim), jnp.float32)
    hidden = jax.random.normal(k_hid, (B, decoder_dim), jnp.float32)

    # Deterministic parameter init (Linear weights stored as (in, out)).
    params = {
        "U_w": jax.random.normal(k_uw, (encoder_dim, attention_dim), jnp.float32) * 0.05,
        "U_b": jax.random.normal(k_ub, (1, attention_dim), jnp.float32) * 0.05,
        "W_w": jax.random.normal(k_ww, (decoder_dim, attention_dim), jnp.float32) * 0.05,
        "W_b": jax.random.normal(k_wb, (1, attention_dim), jnp.float32) * 0.05,
        "A_w": jax.random.normal(k_aw, (attention_dim, 1), jnp.float32) * 0.05,
        "A_b": jax.random.normal(k_ab, (1, 1), jnp.float32) * 0.05,
    }

    out = attention_forward(encoder_outputs, hidden, params)
    out = jax.block_until_ready(out)

    ref = _reference(encoder_outputs, hidden, params)
    assert out.shape == (B, N)
    # bf16 MXU operands + approximate EUP reciprocal -> looser tolerance
    # than the previous all-f32 "highest" version.
    assert jnp.allclose(out, ref, atol=2e-3), "mismatch vs reference"
    assert jnp.allclose(jnp.sum(out, axis=1), jnp.ones((B,)), atol=1e-2)

    print("KERNEL_OK")
</pallas_src>

<mosaic_0001>
module attributes {stable_mosaic.version = 11 : i64} {
  func.func @_attention_kernel(%arg0: i32, %arg1: memref<2x32x256xbf16, #tpu.memory_space<vmem>>, %arg2: memref<2x1x128xf32, #tpu.memory_space<vmem>>, %arg3: memref<256x128xbf16, #tpu.memory_space<vmem>>, %arg4: memref<1x128xf32, #tpu.memory_space<vmem>>, %arg5: memref<1x128xf32, #tpu.memory_space<vmem>>, %arg6: memref<2x1x128xf32, #tpu.memory_space<vmem>>) attributes {dimension_semantics = [#tpu.dimension_semantics<parallel>], iteration_bounds = array<i64: 2>, scalar_prefetch = 0 : i64, scratch_operands = 0 : i64, tpu.core_type = #tpu.core_type<tc>, window_params = [{transform_indices = @transform_0, window_bounds = array<i64: 2, 32, 256>}, {transform_indices = @transform_1, window_bounds = array<i64: 2, 1, 128>}, {pipeline_mode = #tpu.pipeline_mode<synchronous>, transform_indices = @transform_2, window_bounds = array<i64: 256, 128>}, {pipeline_mode = #tpu.pipeline_mode<synchronous>, transform_indices = @transform_3, window_bounds = array<i64: 1, 128>}, {pipeline_mode = #tpu.pipeline_mode<synchronous>, transform_indices = @transform_4, window_bounds = array<i64: 1, 128>}, {transform_indices = @transform_5, window_bounds = array<i64: 2, 1, 128>}]} {
    %c0 = arith.constant 0 : index
    %c0_0 = arith.constant 0 : index
    %c0_1 = arith.constant 0 : index
    %0 = vector.load %arg1[%c0, %c0_0, %c0_1] : memref<2x32x256xbf16, #tpu.memory_space<vmem>>, vector<2x32x256xbf16>
    %1 = vector.shape_cast %0 : vector<2x32x256xbf16> to vector<64x256xbf16>
    %c0_2 = arith.constant 0 : index
    %c0_3 = arith.constant 0 : index
    %2 = vector.load %arg3[%c0_2, %c0_3] : memref<256x128xbf16, #tpu.memory_space<vmem>>, vector<256x128xbf16>
    %cst = arith.constant dense<0.000000e+00> : vector<64x128xf32>
    %3 = tpu.matmul %1, %2, %cst {dimension_numbers = #tpu.dot_dimension_numbers<[1], [0], [0], [1], [0, 0, 1, 1], [], []>} : vector<64x256xbf16>, vector<256x128xbf16>, vector<64x128xf32> -> vector<64x128xf32>
    %c0_4 = arith.constant 0 : index
    %c0_5 = arith.constant 0 : index
    %4 = vector.load %arg4[%c0_4, %c0_5] : memref<1x128xf32, #tpu.memory_space<vmem>>, vector<1x128xf32>
    %5 = vector.broadcast %4 : vector<1x128xf32> to vector<64x128xf32>
    %6 = arith.addf %3, %5 : vector<64x128xf32>
    %7 = vector.shape_cast %6 : vector<64x128xf32> to vector<2x32x128xf32>
    %c0_6 = arith.constant 0 : index
    %c0_7 = arith.constant 0 : index
    %c0_8 = arith.constant 0 : index
    %8 = vector.load %arg2[%c0_6, %c0_7, %c0_8] : memref<2x1x128xf32, #tpu.memory_space<vmem>>, vector<2x1x128xf32>
    %9 = vector.broadcast %8 : vector<2x1x128xf32> to vector<2x32x128xf32>
    %10 = arith.addf %7, %9 : vector<2x32x128xf32>
    %11 = math.tanh %10 : vector<2x32x128xf32>
    %c0_9 = arith.constant 0 : index
    %c0_10 = arith.constant 0 : index
    %12 = vector.load %arg5[%c0_9, %c0_10] : memref<1x128xf32, #tpu.memory_space<vmem>>, vector<1x128xf32>
    %13 = vector.shape_cast %12 : vector<1x128xf32> to vector<1x1x128xf32>
    %14 = vector.broadcast %13 : vector<1x1x128xf32> to vector<2x32x128xf32>
    %15 = arith.mulf %11, %14 : vector<2x32x128xf32>
    %cst_11 = arith.constant dense<0.000000e+00> : vector<2x32xf32>
    %16 = vector.multi_reduction <add>, %15, %cst_11 [2] : vector<2x32x128xf32> to vector<2x32xf32>
    %cst_12 = arith.constant 0.000000e+00 : f32
    %17 = vector.broadcast %cst_12 : f32 to vector<2x96xf32>
    %18 = tpu.concatenate %16, %17 in 1 : vector<2x32xf32>, vector<2x96xf32> -> vector<2x128xf32>
    %19 = tpu.iota {dimensions = array<i32: 1>} : vector<2x128xi32>
    %c32_i32 = arith.constant 32 : i32
    %20 = vector.broadcast %c32_i32 : i32 to vector<2x128xi32>
    %21 = arith.cmpi slt, %19, %20 : vector<2x128xi32>
    %cst_13 = arith.constant -1.000000e+30 : f32
    %22 = vector.broadcast %cst_13 : f32 to vector<2x128xf32>
    %23 = arith.select %21, %18, %22 : vector<2x128xi1>, vector<2x128xf32>
    %cst_14 = arith.constant dense<0xFF800000> : vector<2xf32>
    %24 = vector.multi_reduction <maximumf>, %23, %cst_14 [1] : vector<2x128xf32> to vector<2xf32>
    %25 = vector.shape_cast %24 : vector<2xf32> to vector<2x1xf32>
    %26 = vector.broadcast %25 : vector<2x1xf32> to vector<2x128xf32>
    %27 = arith.subf %23, %26 : vector<2x128xf32>
    %28 = math.exp %27 : vector<2x128xf32>
    %cst_15 = arith.constant dense<0.000000e+00> : vector<2xf32>
    %29 = vector.multi_reduction <add>, %28, %cst_15 [1] : vector<2x128xf32> to vector<2xf32>
    %30 = vector.shape_cast %29 : vector<2xf32> to vector<2x1xf32>
    %31 = tpu.reciprocal %30 {approx = true} : vector<2x1xf32> -> vector<2x1xf32>
    %32 = vector.broadcast %31 : vector<2x1xf32> to vector<2x128xf32>
    %33 = arith.mulf %28, %32 : vector<2x128xf32>
    %34 = vector.shape_cast %33 : vector<2x128xf32> to vector<2x1x128xf32>
    %c0_16 = arith.constant 0 : index
    %c0_17 = arith.constant 0 : index
    %c0_18 = arith.constant 0 : index
    %35 = vector.load %arg6[%c0_16, %c0_17, %c0_18] : memref<2x1x128xf32, #tpu.memory_space<vmem>>, vector<2x1x128xf32>
    tpu.vector_store %arg6[%c0_16, %c0_17, %c0_18], %34 {strides = array<i32>} : memref<2x1x128xf32, #tpu.memory_space<vmem>>, vector<2x1x128xf32>,
    return
  }
  func.func @transform_0(%arg0: i32) -> (i32, i32, i32) {
    %c0_i32 = arith.constant 0 : i32
    %c0_i32_0 = arith.constant 0 : i32
    %c0_i32_1 = arith.constant 0 : i32
    return %arg0, %c0_i32, %c0_i32_0 : i32, i32, i32
  }
  func.func @transform_1(%arg0: i32) -> (i32, i32, i32) {
    %c0_i32 = arith.constant 0 : i32
    %c0_i32_0 = arith.constant 0 : i32
    %c0_i32_1 = arith.constant 0 : i32
    return %arg0, %c0_i32, %c0_i32_0 : i32, i32, i32
  }
  func.func @transform_2(%arg0: i32) -> (i32, i32) {
    %c0_i32 = arith.constant 0 : i32
    %c0_i32_0 = arith.constant 0 : i32
    %c0_i32_1 = arith.constant 0 : i32
    return %c0_i32, %c0_i32_0 : i32, i32
  }
  func.func @transform_3(%arg0: i32) -> (i32, i32) {
    %c0_i32 = arith.constant 0 : i32
    %c0_i32_0 = arith.constant 0 : i32
    %c0_i32_1 = arith.constant 0 : i32
    return %c0_i32, %c0_i32_0 : i32, i32
  }
  func.func @transform_4(%arg0: i32) -> (i32, i32) {
    %c0_i32 = arith.constant 0 : i32
    %c0_i32_0 = arith.constant 0 : i32
    %c0_i32_1 = arith.constant 0 : i32
    return %c0_i32, %c0_i32_0 : i32, i32
  }
  func.func @transform_5(%arg0: i32) -> (i32, i32, i32) {
    %c0_i32 = arith.constant 0 : i32
    %c0_i32_0 = arith.constant 0 : i32
    %c0_i32_1 = arith.constant 0 : i32
    return %arg0, %c0_i32, %c0_i32_0 : i32, i32, i32
  }
}

</mosaic_0001>

<llo_original>
// kernel: tpu_custom_call.1
$region0: #{tpu_custom_call.1}
  #allocation0 [shape = 'u32[]', space=smem, size = 0x4, offset = 0x4, fixed_abs, tag = 'smem constant byte address 0x4 - core index']
  #allocation1 [shape = 'u32[144,128]{1,0:T(1,128)}', space=vmem, size = 0x12000, scoped, tag = 'internal scratch']
  %s0 = inlined_call_operand.hbm [shape: bf16[4,32,256], index: 0, kind: input, shape index: {}]
  %s1 = inlined_call_operand.hbm [shape: f32[4,1,128], index: 1, kind: input, shape index: {}]
  %s2 = inlined_call_operand.hbm [shape: bf16[256,128], index: 2, kind: input, shape index: {}]
  %s3 = inlined_call_operand.vmem [shape: f32[1,128], index: 3, kind: input, shape index: {}]
  %s4 = inlined_call_operand.vmem [shape: f32[1,128], index: 4, kind: input, shape index: {}]
  %s5 = inlined_call_operand.hbm [shape: f32[4,1,128], index: 5, kind: output, shape index: {}]
  %s6 = sld [smem:[#allocation0]]
  $region65: #{tpu_custom_call.1} parent=0
    _
  %s8 = ssub.s32 1, %s6
  %s9 = scalar_select 0, %s8, %s6
  $region1: #{tpu_custom_call.1} parent=0
    #allocation2 [shape = 'u8[65536]{0}', space=vmem, size = 0x10000, scoped, tag = 'input window, operand 0']
    #allocation3 [shape = 's32[2]{0}', space=sflag, size = 0x8, scoped, tag = 'scoped memory for tpu_custom_call.1']
    #allocation4 [shape = 's32[2]{0}', space=sflag, size = 0x8, scoped, tag = 'scoped memory for tpu_custom_call.1']
    #allocation5 [shape = 'u8[2048]{0}', space=vmem, size = 0x800, scoped, tag = 'input window, operand 1']
    #allocation6 [shape = 's32[2]{0}', space=sflag, size = 0x8, scoped, tag = 'scoped memory for tpu_custom_call.1']
    #allocation7 [shape = 'u8[65536]{0}', space=vmem, size = 0x10000, scoped, tag = 'input window, operand 2, single buffered']
    #allocation8 [shape = 'u8[2048]{0}', space=vmem, size = 0x800, scoped, tag = 'output window, operand 0']
    %10 = vsyncpa [#allocation3], 0
    %s11 = scalar_lea.sflag [#allocation3], 1
    %12 = vsyncpa %s11, 0
    %13 = vsyncpa [#allocation6], 0
    %s14 = scalar_lea.sflag [#allocation6], 1
    %15 = vsyncpa %s14, 0
    %16 = vsyncpa [#allocation4], 0
    %s17 = scalar_lea.sflag [#allocation4], 1
    %18 = vsyncpa %s17, 0
    loop: start=0, step=1, limit=4
    $region2: #{tpu_custom_call.1} parent=1 // loop_pre_header
      _
    $region3: #{tpu_custom_call.1} parent=1 // loop_header
      %s20 = sphi 0, %s24
      %p21 = scmp.ge.s32.totalorder %s20, 4
      %s30 = sphi 0, %s32
      %s33 = sphi 0, %s30
      %s34 = sphi 0, %s33
      %s50 = sphi 0, %s34
      %s56 = sphi 0, %s58
      %s59 = sphi 0, %s56
      %s60 = sphi 0, %s59
      %s76 = sphi 0, %s60
      %s80 = sphi 0, %s80
      %s82 = sphi 0, %s80
      %s83 = sphi 0, %s82
      %s97 = sphi 0, %s83
      %s101 = sphi 0, %s101
      %s103 = sphi 0, %s101
      %s104 = sphi 0, %s103
      %s118 = sphi 0, %s104
      %s122 = sphi 0, %s122
      %s124 = sphi 0, %s122
      %s125 = sphi 0, %s124
      %s139 = sphi 0, %s125
      %s145 = sphi 0, %s147
      %s148 = sphi 0, %s145
      %s149 = sphi 0, %s148
      %s165 = sphi 0, %s149
    $region4: #{tpu_custom_call.1} parent=1 // loop_header_branch
      %23 = sbr.rel (%p21) target = $region8
    $region5: #{tpu_custom_call.1} parent=1 // loop_body
      %s25 = ssub.s32 %s20, 1
      %s26 = ssub.s32 %s20, 2
      %s27 = sadd.s32 %s20, 1
      %s28 = ssub.s32 %s20, %s27
      %p29 = scmp.eq.s32.totalorder %s28, 0
      %s31 = sadd.s32 %s30, 1
      %s32 = scalar_select %p29, %s30, %s31
      %p35 = pneg %p29
      %p36 = scmp.eq.s32.totalorder %s20, 1
      %p37 = por %p35, %p36
      %p38 = scmp.ne.s32.totalorder %s30, %s33
      %p39 = scmp.eq.s32.totalorder %s20, 0
      %p40 = por %p38, %p39
      %p41 = scmp.ne.s32.totalorder %s30, %s33
      %p42 = scmp.eq.s32.totalorder %s25, 1
      %p43 = por %p41, %p42
      %p44 = scmp.ne.s32.totalorder %s33, %s34
      %p45 = scmp.eq.s32.totalorder %s25, 0
      %p46 = por %p44, %p45
      %p47 = scmp.ne.s32.totalorder %s33, %s34
      %p48 = scmp.eq.s32.totalorder %s26, 1
      %p49 = por %p47, %p48
      %p51 = scmp.ne.s32.totalorder %s34, %s50
      %p52 = scmp.eq.s32.totalorder %s26, 0
      %p53 = por %p51, %p52
      %s54 = ssub.s32 %s20, %s27
      %p55 = scmp.eq.s32.totalorder %s54, 0
      %s57 = sadd.s32 %s56, 1
      %s58 = scalar_select %p55, %s56, %s57
      %p61 = pneg %p55
      %p62 = scmp.eq.s32.totalorder %s20, 1
      %p63 = por %p61, %p62
      %p64 = scmp.ne.s32.totalorder %s56, %s59
      %p65 = scmp.eq.s32.totalorder %s20, 0
      %p66 = por %p64, %p65
      %p67 = scmp.ne.s32.totalorder %s56, %s59
      %p68 = scmp.eq.s32.totalorder %s25, 1
      %p69 = por %p67, %p68
      %p70 = scmp.ne.s32.totalorder %s59, %s60
      %p71 = scmp.eq.s32.totalorder %s25, 0
      %p72 = por %p70, %p71
      %p73 = scmp.ne.s32.totalorder %s59, %s60
      %p74 = scmp.eq.s32.totalorder %s26, 1
      %p75 = por %p73, %p74
      %p77 = scmp.ne.s32.totalorder %s60, %s76
      %p78 = scmp.eq.s32.totalorder %s26, 0
      %p79 = por %p77, %p78
      %s81 = sadd.s32 %s80, 1
      %p84 = scmp.eq.s32.totalorder %s20, 1
      %p85 = scmp.ne.s32.totalorder %s80, %s82
      %p86 = scmp.eq.s32.totalorder %s20, 0
      %p87 = por %p85, %p86
      %p88 = scmp.ne.s32.totalorder %s80, %s82
      %p89 = scmp.eq.s32.totalorder %s25, 1
      %p90 = por %p88, %p89
      %p91 = scmp.ne.s32.totalorder %s82, %s83
      %p92 = scmp.eq.s32.totalorder %s25, 0
      %p93 = por %p91, %p92
      %p94 = scmp.ne.s32.totalorder %s82, %s83
      %p95 = scmp.eq.s32.totalorder %s26, 1
      %p96 = por %p94, %p95
      %p98 = scmp.ne.s32.totalorder %s83, %s97
      %p99 = scmp.eq.s32.totalorder %s26, 0
      %p100 = por %p98, %p99
      %s102 = sadd.s32 %s101, 1
      %p105 = scmp.eq.s32.totalorder %s20, 1
      %p106 = scmp.ne.s32.totalorder %s101, %s103
      %p107 = scmp.eq.s32.totalorder %s20, 0
      %p108 = por %p106, %p107
      %p109 = scmp.ne.s32.totalorder %s101, %s103
      %p110 = scmp.eq.s32.totalorder %s25, 1
      %p111 = por %p109, %p110
      %p112 = scmp.ne.s32.totalorder %s103, %s104
      %p113 = scmp.eq.s32.totalorder %s25, 0
      %p114 = por %p112, %p113
      %p115 = scmp.ne.s32.totalorder %s103, %s104
      %p116 = scmp.eq.s32.totalorder %s26, 1
      %p117 = por %p115, %p116
      %p119 = scmp.ne.s32.totalorder %s104, %s118
      %p120 = scmp.eq.s32.totalorder %s26, 0
      %p121 = por %p119, %p120
      %s123 = sadd.s32 %s122, 1
      %p126 = scmp.eq.s32.totalorder %s20, 1
      %p127 = scmp.ne.s32.totalorder %s122, %s124
      %p128 = scmp.eq.s32.totalorder %s20, 0
      %p129 = por %p127, %p128
      %p130 = scmp.ne.s32.totalorder %s122, %s124
      %p131 = scmp.eq.s32.totalorder %s25, 1
      %p132 = por %p130, %p131
      %p133 = scmp.ne.s32.totalorder %s124, %s125
      %p134 = scmp.eq.s32.totalorder %s25, 0
      %p135 = por %p133, %p134
      %p136 = scmp.ne.s32.totalorder %s124, %s125
      %p137 = scmp.eq.s32.totalorder %s26, 1
      %p138 = por %p136, %p137
      %p140 = scmp.ne.s32.totalorder %s125, %s139
      %p141 = scmp.eq.s32.totalorder %s26, 0
      %p142 = por %p140, %p141
      %s143 = ssub.s32 %s20, %s27
      %p144 = scmp.eq.s32.totalorder %s143, 0
      %s146 = sadd.s32 %s145, 1
      %s147 = scalar_select %p144, %s145, %s146
      %p150 = pneg %p144
      %p151 = scmp.eq.s32.totalorder %s20, 1
      %p152 = por %p150, %p151
      %p153 = scmp.ne.s32.totalorder %s145, %s148
      %p154 = scmp.eq.s32.totalorder %s20, 0
      %p155 = por %p153, %p154
      %p156 = scmp.ne.s32.totalorder %s145, %s148
      %p157 = scmp.eq.s32.totalorder %s25, 1
      %p158 = por %p156, %p157
      %p159 = scmp.ne.s32.totalorder %s148, %s149
      %p160 = scmp.eq.s32.totalorder %s25, 0
      %p161 = por %p159, %p160
      %p162 = scmp.ne.s32.totalorder %s148, %s149
      %p163 = scmp.eq.s32.totalorder %s26, 1
      %p164 = por %p162, %p163
      %p166 = scmp.ne.s32.totalorder %s149, %s165
      %p167 = scmp.eq.s32.totalorder %s26, 0
      %p168 = por %p166, %p167
      %p169 = scmp.le.s32.totalorder 1, %s20
      %p170 = scmp.lt.s32.totalorder %s20, 3
      %p171 = pnand %p169, %p170
      %p172 = pneg %p171
      // Predicated region
      $region9: #{tpu_custom_call.1} parent=5 // pred_check
        _
      $region10: #{tpu_custom_call.1} parent=5 // pred_check_branch
        %174 = sbr.rel (%p171) target = $region12
      $region11: #{tpu_custom_call.1} parent=5 // pred_region
        %s175 = ssub.s32 %s20, 1
        // Predicated region
        $region13: #{tpu_custom_call.1} parent=11 // pred_check
          %p176 = pneg %p93
        $region14: #{tpu_custom_call.1} parent=11 // pred_check_branch
          %178 = sbr.rel (%p176) target = $region16
        $region15: #{tpu_custom_call.1} parent=11 // pred_region
          %s180 = ssub.s32 2048, 2048
          %181 = vsyncadd [#allocation6], %s180
          %s182 = sshll.u32 [#allocation7], 4
          %s183 = int_to_ptr.vmem [resolvable:$true] %s182
          %188 = dma.hbm_to_vmem [thread:$0]  %s2, 2048, %s183, [#allocation6], 64, 64, 4
        $region16: #{tpu_custom_call.1} parent=11 // pred_fallthru
          _
        // Predicated region
        $region17: #{tpu_custom_call.1} parent=11 // pred_check
          %p189 = pneg %p114
        $region18: #{tpu_custom_call.1} parent=11 // pred_check_branch
          %191 = sbr.rel (%p189) target = $region20
        $region19: #{tpu_custom_call.1} parent=11 // pred_region
          _
        $region20: #{tpu_custom_call.1} parent=11 // pred_fallthru
          _
        // Predicated region
        $region21: #{tpu_custom_call.1} parent=11 // pred_check
          %p192 = pneg %p135
        $region22: #{tpu_custom_call.1} parent=11 // pred_check_branch
          %194 = sbr.rel (%p192) target = $region24
        $region23: #{tpu_custom_call.1} parent=11 // pred_region
          _
        $region24: #{tpu_custom_call.1} parent=11 // pred_fallthru
          _
      $region12: #{tpu_custom_call.1} parent=5 // pred_fallthru
        _
      %p195 = scmp.lt.s32.totalorder %s20, 2
      // Predicated region
      $region25: #{tpu_custom_call.1} parent=5 // pred_check
        %p196 = pneg %p195
      $region26: #{tpu_custom_call.1} parent=5 // pred_check_branch
        %198 = sbr.rel (%p196) target = $region28
      $region27: #{tpu_custom_call.1} parent=5 // pred_region
        // Predicated region
        $region29: #{tpu_custom_call.1} parent=27 // pred_check
          %p199 = pneg %p40
        $region30: #{tpu_custom_call.1} parent=27 // pred_check_branch
          %201 = sbr.rel (%p199) target = $region32
        $region31: #{tpu_custom_call.1} parent=27 // pred_region
          %s202 = sand.u32 %s30, 1
          %s203 = scalar_lea.sflag [#allocation3], %s202
          %s204 = sand.u32 %s30, 1
          %s205 = smul.addr %s204, 64
          %s206 = scalar_lea.vmem [#allocation2], %s205
          %s207 = smul.u32 2, %s20
          %s209 = ssub.s32 1024, 1024
          %210 = vsyncadd %s203, %s209
          %s211 = smul.addr %s207, 8
          %s212 = smul.addr %s211, 64
          %s213 = scalar_lea.hbm %s0, %s212
          %s214 = sshll.u32 %s206, 4
          %s215 = int_to_ptr.vmem [resolvable:$true] %s214
          %220 = dma.hbm_to_vmem [thread:$0]  %s213, 1024, %s215, %s203, 128, 128, 8
        $region32: #{tpu_custom_call.1} parent=27 // pred_fallthru
          _
        // Predicated region
        $region33: #{tpu_custom_call.1} parent=27 // pred_check
          %p221 = pneg %p66
        $region34: #{tpu_custom_call.1} parent=27 // pred_check_branch
          %223 = sbr.rel (%p221) target = $region36
        $region35: #{tpu_custom_call.1} parent=27 // pred_region
          %s224 = sand.u32 %s20, 1
          %s225 = scalar_lea.sflag [#allocation6], %s224
          %s226 = sand.u32 %s56, 1
          %s227 = smul.addr %s226, 2
          %s228 = scalar_lea.vmem [#allocation5], %s227
          %s229 = smul.u32 2, %s20
          %s231 = ssub.s32 32, 32
          %232 = vsyncadd %s225, %s231
          %s233 = smul.addr %s229, 16
          %s234 = scalar_lea.hbm %s1, %s233
          %s235 = sshll.u32 %s228, 4
          %s236 = int_to_ptr.vmem [resolvable:$true] %s235
          %241 = dma.hbm_to_vmem [thread:$0]  %s234, 32, %s236, %s225, 16, 16, 1
        $region36: #{tpu_custom_call.1} parent=27 // pred_fallthru
          _
      $region28: #{tpu_custom_call.1} parent=5 // pred_fallthru
        _
      %p242 = scmp.le.s32.totalorder 1, %s20
      %p243 = scmp.lt.s32.totalorder %s20, 3
      %p244 = pnand %p242, %p243
      %p245 = pneg %p244
      // Predicated region
      $region37: #{tpu_custom_call.1} parent=5 // pred_check
        _
      $region38: #{tpu_custom_call.1} parent=5 // pred_check_branch
        %247 = sbr.rel (%p244) target = $region40
      $region39: #{tpu_custom_call.1} parent=5 // pred_region
        %s248 = ssub.s32 %s20, 1
        %s249 = sand.u32 %s33, 1
        %s250 = scalar_lea.sflag [#allocation3], %s249
        %s251 = sand.u32 %s33, 1
        %s252 = smul.addr %s251, 64
        %s253 = scalar_lea.vmem [#allocation2], %s252
        // Predicated region
        $region41: #{tpu_custom_call.1} parent=39 // pred_check
          %p254 = pneg %p46
        $region42: #{tpu_custom_call.1} parent=39 // pred_check_branch
          %256 = sbr.rel (%p254) target = $region44
        $region43: #{tpu_custom_call.1} parent=39 // pred_region
          %257 = dma.done %s250, 1024
        $region44: #{tpu_custom_call.1} parent=39 // pred_fallthru
          _
        %s258 = sand.u32 %s25, 1
        %s259 = scalar_lea.sflag [#allocation6], %s258
        %s260 = sand.u32 %s59, 1
        %s261 = smul.addr %s260, 2
        %s262 = scalar_lea.vmem [#allocation5], %s261
        // Predicated region
        $region45: #{tpu_custom_call.1} parent=39 // pred_check
          %p263 = pneg %p72
        $region46: #{tpu_custom_call.1} parent=39 // pred_check_branch
          %265 = sbr.rel (%p263) target = $region48
        $region47: #{tpu_custom_call.1} parent=39 // pred_region
          %266 = dma.done %s259, 32
        $region48: #{tpu_custom_call.1} parent=39 // pred_fallthru
          _
        // Predicated region
        $region49: #{tpu_custom_call.1} parent=39 // pred_check
          %p267 = pneg %p93
        $region50: #{tpu_custom_call.1} parent=39 // pred_check_branch
          %269 = sbr.rel (%p267) target = $region52
        $region51: #{tpu_custom_call.1} parent=39 // pred_region
          %270 = dma.done [#allocation6], 2048
        $region52: #{tpu_custom_call.1} parent=39 // pred_fallthru
          _
        %s271 = sand.u32 %s33, 1
        %s272 = scalar_lea.sflag [#allocation3], %s271
        %s273 = sand.u32 %s33, 1
        %s274 = smul.addr %s273, 64
        %s275 = scalar_lea.vmem [#allocation2], %s274
        %p276 = pneg %p46
        %p277 = pneg %p43
        %s278 = sand.u32 %s25, 1
        %s279 = scalar_lea.sflag [#allocation6], %s278
        %s280 = sand.u32 %s59, 1
        %s281 = smul.addr %s280, 2
        %s282 = scalar_lea.vmem [#allocation5], %s281
        %p283 = pneg %p72
        %p284 = pneg %p69
        %p285 = pneg %p93
        %p286 = pneg %p90
        %p287 = pneg %p114
        %p288 = pneg %p111
        %p289 = pneg %p135
        %p290 = pneg %p132
        %p291 = pneg %p161
        %p292 = pneg %p158
        %s293 = sand.u32 %s148, 1
        %s294 = scalar_lea.sflag [#allocation4], %s293
        %s295 = sand.u32 %s148, 1
        %s296 = smul.addr %s295, 2
        %s297 = scalar_lea.vmem [#allocation8], %s296
        %s298 = smul.u32 2, %s25
        %s299 = smul.u32 2, %s25
        %s300 = smul.u32 2, %s25
        %v302 = vld [vmem:[%s253] sm:$0xff]
        %v303 = vld [vmem:[%s253 + $0x8] sm:$0xff]
        %v304 = vld [vmem:[%s253 + $0x10] sm:$0xff]
        %v305 = vld [vmem:[%s253 + $0x18] sm:$0xff]
        %v306 = vld [vmem:[%s253 + $0x20] sm:$0xff]
        %v307 = vld [vmem:[%s253 + $0x28] sm:$0xff]
        %v308 = vld [vmem:[%s253 + $0x30] sm:$0xff]
        %v309 = vld [vmem:[%s253 + $0x38] sm:$0xff]
        %v310 = vld [vmem:[#allocation7] sm:$0xf]
        %v311 = vld [vmem:[#allocation7 + $0x4] sm:$0xf]
        %v312 = vld [vmem:[#allocation7 + $0x8] sm:$0xf]
        %v313 = vld [vmem:[#allocation7 + $0xc] sm:$0xf]
        %v314 = vld [vmem:[#allocation7 + $0x10] sm:$0xf]
        %v315 = vld [vmem:[#allocation7 + $0x14] sm:$0xf]
        %v316 = vld [vmem:[#allocation7 + $0x18] sm:$0xf]
        %v317 = vld [vmem:[#allocation7 + $0x1c] sm:$0xf]
        %v318 = vld [vmem:[#allocation7 + $0x20] sm:$0xf]
        %v319 = vld [vmem:[#allocation7 + $0x24] sm:$0xf]
        %v320 = vld [vmem:[#allocation7 + $0x28] sm:$0xf]
        %v321 = vld [vmem:[#allocation7 + $0x2c] sm:$0xf]
        %v322 = vld [vmem:[#allocation7 + $0x30] sm:$0xf]
        %v323 = vld [vmem:[#allocation7 + $0x34] sm:$0xf]
        %v324 = vld [vmem:[#allocation7 + $0x38] sm:$0xf]
        %v325 = vld [vmem:[#allocation7 + $0x3c] sm:$0xf]
        %v326 = vld [vmem:[#allocation7 + $0x40] sm:$0xf]
        %v327 = vld [vmem:[#allocation7 + $0x44] sm:$0xf]
        %v328 = vld [vmem:[#allocation7 + $0x48] sm:$0xf]
        %v329 = vld [vmem:[#allocation7 + $0x4c] sm:$0xf]
        %v330 = vld [vmem:[#allocation7 + $0x50] sm:$0xf]
        %v331 = vld [vmem:[#allocation7 + $0x54] sm:$0xf]
        %v332 = vld [vmem:[#allocation7 + $0x58] sm:$0xf]
        %v333 = vld [vmem:[#allocation7 + $0x5c] sm:$0xf]
        %v334 = vld [vmem:[#allocation7 + $0x60] sm:$0xf]
        %v335 = vld [vmem:[#allocation7 + $0x64] sm:$0xf]
        %v336 = vld [vmem:[#allocation7 + $0x68] sm:$0xf]
        %v337 = vld [vmem:[#allocation7 + $0x6c] sm:$0xf]
        %v338 = vld [vmem:[#allocation7 + $0x70] sm:$0xf]
        %v339 = vld [vmem:[#allocation7 + $0x74] sm:$0xf]
        %v340 = vld [vmem:[#allocation7 + $0x78] sm:$0xf]
        %v341 = vld [vmem:[#allocation7 + $0x7c] sm:$0xf]
        %v342 = vld [vmem:[%s3] sm:$0x1]
        %v344 = vlaneseq
        %v345 = vshrl.u32 %v344, 7
        %v346 = vsub.s32 0, %v345
        %v347 = vrot.slane %v342, %v346
        %v357 = vunpack.c.l.b16 %v302
        %v358 = vunpack.c.h.b16 %v302
        %v359 = vunpack.c.l.b16 %v303
        %v360 = vunpack.c.h.b16 %v303
        %v361 = vunpack.c.l.b16 %v304
        %v362 = vunpack.c.h.b16 %v304
        %v363 = vunpack.c.l.b16 %v305
        %v364 = vunpack.c.h.b16 %v305
        %v365 = vunpack.c.l.b16 %v306
        %v366 = vunpack.c.h.b16 %v306
        %v367 = vunpack.c.l.b16 %v307
        %v368 = vunpack.c.h.b16 %v307
        %v369 = vunpack.c.l.b16 %v308
        %v370 = vunpack.c.h.b16 %v308
        %v371 = vunpack.c.l.b16 %v309
        %v372 = vunpack.c.h.b16 %v309
        %v373 = vpack.c.b16 %v359, %v357
        %v374 = vpack.c.b16 %v360, %v358
        %v375 = vpack.c.b16 %v363, %v361
        %v376 = vpack.c.b16 %v364, %v362
        %v377 = vpack.c.b16 %v367, %v365
        %v378 = vpack.c.b16 %v368, %v366
        %v379 = vpack.c.b16 %v371, %v369
        %v380 = vpack.c.b16 %v372, %v370
        %v421 = vunpack.c.l.b16 %v310
        %v422 = vunpack.c.l.b16 %v311
        %v423 = vunpack.c.l.b16 %v312
        %v424 = vunpack.c.l.b16 %v313
        %v425 = vunpack.c.l.b16 %v314
        %v426 = vunpack.c.l.b16 %v315
        %v427 = vunpack.c.l.b16 %v316
        %v428 = vunpack.c.l.b16 %v317
        %v429 = vunpack.c.l.b16 %v318
        %v430 = vunpack.c.l.b16 %v319
        %v431 = vunpack.c.l.b16 %v320
        %v432 = vunpack.c.l.b16 %v321
        %v433 = vunpack.c.l.b16 %v322
        %v434 = vunpack.c.l.b16 %v323
        %v435 = vunpack.c.l.b16 %v324
        %v436 = vunpack.c.l.b16 %v325
        %v437 = vunpack.c.l.b16 %v326
        %v438 = vunpack.c.l.b16 %v327
        %v439 = vunpack.c.l.b16 %v328
        %v440 = vunpack.c.l.b16 %v329
        %v441 = vunpack.c.l.b16 %v330
        %v442 = vunpack.c.l.b16 %v331
        %v443 = vunpack.c.l.b16 %v332
        %v444 = vunpack.c.l.b16 %v333
        %v445 = vunpack.c.l.b16 %v334
        %v446 = vunpack.c.l.b16 %v335
        %v447 = vunpack.c.l.b16 %v336
        %v448 = vunpack.c.l.b16 %v337
        %v449 = vunpack.c.l.b16 %v338
        %v450 = vunpack.c.l.b16 %v339
        %v451 = vunpack.c.l.b16 %v340
        %v452 = vunpack.c.l.b16 %v341
        %v453 = vpack.c.b16 %v422, %v421
        %v454 = vpack.c.b16 %v424, %v423
        %v455 = vpack.c.b16 %v426, %v425
        %v456 = vpack.c.b16 %v428, %v427
        %v457 = vpack.c.b16 %v430, %v429
        %v458 = vpack.c.b16 %v432, %v431
        %v459 = vpack.c.b16 %v434, %v433
        %v460 = vpack.c.b16 %v436, %v435
        %v461 = vpack.c.b16 %v438, %v437
        %v462 = vpack.c.b16 %v440, %v439
        %v463 = vpack.c.b16 %v442, %v441
        %v464 = vpack.c.b16 %v444, %v443
        %v465 = vpack.c.b16 %v446, %v445
        %v466 = vpack.c.b16 %v448, %v447
        %v467 = vpack.c.b16 %v450, %v449
        %v468 = vpack.c.b16 %v452, %v451
        %485 = vmatprep.subr.bf16.mxu0 0
        %486 = vmatpush1.bf16.msra.mxu0 %v453
        %487 = vmatprep.subr.bf16.mxu0 0
        %488 = vmatpush1.bf16.msra.mxu0 %v454
        %489 = vmatprep.subr.bf16.mxu0 0
        %490 = vmatpush1.bf16.msra.mxu0 %v455
        %491 = vmatprep.subr.bf16.mxu0 0
        %492 = vmatpush1.bf16.msra.mxu0 %v456
        %493 = vmatprep.subr.bf16.mxu0 0
        %494 = vmatpush1.bf16.msra.mxu0 %v457
        %495 = vmatprep.subr.bf16.mxu0 0
        %496 = vmatpush1.bf16.msra.mxu0 %v458
        %497 = vmatprep.subr.bf16.mxu0 0
        %498 = vmatpush1.bf16.msra.mxu0 %v459
        %499 = vmatprep.subr.bf16.mxu0 0
        %500 = vmatpush1.bf16.msra.mxu0 %v460
        %501 = vmatprep.subr.bf16.mxu0 0
        %502 = vmatpush1.bf16.msra.mxu0 %v461
        %503 = vmatprep.subr.bf16.mxu0 0
        %504 = vmatpush1.bf16.msra.mxu0 %v462
        %505 = vmatprep.subr.bf16.mxu0 0
        %506 = vmatpush1.bf16.msra.mxu0 %v463
        %507 = vmatprep.subr.bf16.mxu0 0
        %508 = vmatpush1.bf16.msra.mxu0 %v464
        %509 = vmatprep.subr.bf16.mxu0 0
        %510 = vmatpush1.bf16.msra.mxu0 %v465
        %511 = vmatprep.subr.bf16.mxu0 0
        %512 = vmatpush1.bf16.msra.mxu0 %v466
        %513 = vmatprep.subr.bf16.mxu0 0
        %514 = vmatpush1.bf16.msra.mxu0 %v467
        %515 = vmatprep.subr.bf16.mxu0 0
        %516 = vmatpush1.bf16.msra.mxu0 %v468
        %517 = vmatprep.mubr.bf16.mxu0 %v374
        %518 = vmatmul.mubr.bf16.gmra.mrb[0].mxu0 %v373
        %v519 = vpop.f32.mrb[0].mxu0
        %v520 = vadd.f32 %v347, %v519
        %v521 = vpop.f32.mrb[0].mxu0
        %v522 = vpop.f32.mrb[0].mxu0
        %v523 = vadd.f32 %v347, %v522
        %v524 = vpop.f32.mrb[0].mxu0
        %525 = vmatprep.mubr.bf16.mxu0 %v376
        %526 = vmatmul.mubr.bf16.gmra.mrb[0].mxu0 %v375
        %v527 = vpop.f32.mrb[0].mxu0
        %v528 = vadd.f32 %v347, %v527
        %v529 = vpop.f32.mrb[0].mxu0
        %v530 = vpop.f32.mrb[0].mxu0
        %v531 = vadd.f32 %v347, %v530
        %v532 = vpop.f32.mrb[0].mxu0
        %533 = vmatprep.mubr.bf16.mxu0 %v378
        %534 = vmatmul.mubr.bf16.gmra.mrb[0].mxu0 %v377
        %v535 = vpop.f32.mrb[0].mxu0
        %v536 = vadd.f32 %v347, %v535
        %v537 = vpop.f32.mrb[0].mxu0
        %v538 = vpop.f32.mrb[0].mxu0
        %v539 = vadd.f32 %v347, %v538
        %v540 = vpop.f32.mrb[0].mxu0
        %541 = vmatprep.mubr.bf16.mxu0 %v380
        %542 = vmatmul.mubr.bf16.gmra.mrb[0].mxu0 %v379
        %v543 = vpop.f32.mrb[0].mxu0
        %v544 = vadd.f32 %v347, %v543
        %v545 = vpop.f32.mrb[0].mxu0
        %v546 = vpop.f32.mrb[0].mxu0
        %v547 = vadd.f32 %v347, %v546
        %v548 = vpop.f32.mrb[0].mxu0
        %549 = vdwg.mxu0
        %v550 = vld [vmem:[%s262] sm:$0x1]
        %v551 = vld [vmem:[%s262 + $0x1] sm:$0x1]
        %v554 = vlaneseq
        %v555 = vshrl.u32 %v554, 7
        %v556 = vsub.s32 0, %v555
        %v557 = vrot.slane %v550, %v556
        %v558 = vlaneseq
        %v559 = vshrl.u32 %v558, 7
        %v560 = vsub.s32 0, %v559
        %v561 = vrot.slane %v551, %v560
        %v564 = vadd.f32 %v520, %v557
        %v565 = vadd.f32 %v523, %v557
        %v566 = vadd.f32 %v528, %v557
        %v567 = vadd.f32 %v531, %v557
        %v568 = vadd.f32 %v536, %v561
        %v569 = vadd.f32 %v539, %v561
        %v570 = vadd.f32 %v544, %v561
        %v571 = vadd.f32 %v547, %v561
        %v572 = vtanh.pop %v564
        %v573 = vtanh.pop %v565
        %v574 = vtanh.pop %v566
        %v575 = vtanh.pop %v567
        %v576 = vtanh.pop %v568
        %v577 = vtanh.pop %v569
        %v578 = vtanh.pop %v570
        %v579 = vtanh.pop %v571
        %v580 = vld [vmem:[%s4] sm:$0x1]
        %v582 = vlaneseq
        %v583 = vshrl.u32 %v582, 7
        %v584 = vsub.s32 0, %v583
        %v585 = vrot.slane %v580, %v584
        %v587 = vmul.f32 %v572, %v585
        %v588 = vmul.f32 %v573, %v585
        %v589 = vmul.f32 %v574, %v585
        %v590 = vmul.f32 %v575, %v585
        %v591 = vmul.f32 %v576, %v585
        %v592 = vmul.f32 %v577, %v585
        %v593 = vmul.f32 %v578, %v585
        %v594 = vmul.f32 %v579, %v585
        %595 = vadd.xlane.f32.xlu0 %v587
        %v596 = vpop.xlane.xlu0 %595
        %597 = vadd.xlane.f32.xlu0 %v588
        %v598 = vpop.xlane.xlu0 %597
        %599 = vadd.xlane.f32.xlu0 %v589
        %v600 = vpop.xlane.xlu0 %599
        %601 = vadd.xlane.f32.xlu0 %v590
        %v602 = vpop.xlane.xlu0 %601
        %603 = vadd.xlane.f32.xlu0 %v591
        %v604 = vpop.xlane.xlu0 %603
        %605 = vadd.xlane.f32.xlu0 %v592
        %v606 = vpop.xlane.xlu0 %605
        %607 = vadd.xlane.f32.xlu0 %v593
        %v608 = vpop.xlane.xlu0 %607
        %609 = vadd.xlane.f32.xlu0 %v594
        %v610 = vpop.xlane.xlu0 %609
        %v619 = vlaneseq
        %v620 = vand.u32 %v619, 127
        %v621 = vlaneseq
        %v622 = vshrl.u32 %v621, 7
        %v623 = vsub.s32 %v620, %v622
        %v624 = vrot.slane %v596, %v623
        %v625 = vadd.s32 %v620, 4294967288
        %v626 = vlaneseq
        %v627 = vshrl.u32 %v626, 7
        %v628 = vsub.s32 %v625, %v627
        %v629 = vrot.slane %v598, %v628
        %vm630 = vcmask 130112
        %v631 = vsel %vm630, %v629, %v624
        %v632 = vadd.s32 %v620, 4294967280
        %v633 = vlaneseq
        %v634 = vshrl.u32 %v633, 7
        %v635 = vsub.s32 %v632, %v634
        %v636 = vrot.slane %v600, %v635
        %vm637 = vcmask 195712
        %v638 = vsel %vm637, %v636, %v631
        %v639 = vadd.s32 %v620, 4294967272
        %v640 = vlaneseq
        %v641 = vshrl.u32 %v640, 7
        %v642 = vsub.s32 %v639, %v641
        %v643 = vrot.slane %v602, %v642
        %vm644 = vcmask 261312
        %v645 = vsel %vm644, %v643, %v638
        %v646 = vlaneseq
        %v647 = vshrl.u32 %v646, 7
        %v648 = vsub.s32 %v620, %v647
        %v649 = vrot.slane %v604, %v648
        %v650 = vlaneseq
        %v651 = vshrl.u32 %v650, 7
        %v652 = vsub.s32 %v625, %v651
        %v653 = vrot.slane %v606, %v652
        %v654 = vsel %vm630, %v653, %v649
        %v655 = vlaneseq
        %v656 = vshrl.u32 %v655, 7
        %v657 = vsub.s32 %v632, %v656
        %v658 = vrot.slane %v608, %v657
        %v659 = vsel %vm637, %v658, %v654
        %v660 = vlaneseq
        %v661 = vshrl.u32 %v660, 7
        %v662 = vsub.s32 %v639, %v661
        %v663 = vrot.slane %v610, %v662
        %v664 = vsel %vm644, %v663, %v659
        %vm665 = vcmask 1041409
        %v666 = vsel %vm665, %v664, %v645
        %vm668 = vcmask 261120
        %v669 = vsel %vm668, %v666, 0.0
        %vm670 = vcmp.lt.s32.totalorder %v620, 32
        %v671 = vsel %vm670, %v669, -1e+30
        %vm672 = vcmask 1041408
        %v673 = vsel %vm672, %v671, -inf
        %674 = vmax.xlane.f32.xlu0 %v673
        %v675 = vpop.xlane.xlu0 %674
        %v676 = vsub.f32 %v671, %v675
        %v677 = vmul.f32 %v676, 1.442695
        %v678 = vpow.pop %v677
        %v679 = vsel %vm672, %v678, 0.0
        %680 = vadd.xlane.f32.xlu0 %v679
        %v681 = vpop.xlane.xlu0 %680
        %v682 = vrcp.pop %v681
        %v683 = vmul.f32 %v678, %v682
        %v686 = vunpack.c.l.s4 1966171168
        %v687 = vunpack.c.0.s8 %v686
        %v688 = vlaneseq
        %v689 = vshrl.u32 %v688, 7
        %v690 = vsub.s32 %v687, %v689
        %v691 = vrot.slane %v683, %v690
        %v692 = vcombine.high %v691, %v691
        %v694 = vunpack.c.l.s4 1966171168
        %v695 = vunpack.c.0.s8 %v694
        %v696 = vlaneseq
        %v697 = vshrl.u32 %v696, 7
        %v698 = vsub.s32 %v695, %v697
        %v699 = vrot.slane %v691, %v698
        %v701 = vunpack.c.l.s4 1966171168
        %v702 = vunpack.c.0.s8 %v701
        %v703 = vlaneseq
        %v704 = vshrl.u32 %v703, 7
        %v705 = vsub.s32 %v702, %v704
        %v706 = vrot.slane %v692, %v705
        %709 = vst [vmem:[%s297] sm:$0x1] %v699
        %710 = vst [vmem:[%s297 + $0x1] sm:$0x1] %v706
        %s711 = sand.u32 %s148, 1
        %s712 = scalar_lea.sflag [#allocation4], %s711
        %s713 = sand.u32 %s148, 1
        %s714 = smul.addr %s713, 2
        %s715 = scalar_lea.vmem [#allocation8], %s714
        // Predicated region
        $region53: #{tpu_custom_call.1} parent=39 // pred_check
          %p716 = pneg %p158
        $region54: #{tpu_custom_call.1} parent=39 // pred_check_branch
          %718 = sbr.rel (%p716) target = $region56
        $region55: #{tpu_custom_call.1} parent=39 // pred_region
          %s719 = smul.u32 2, %s25
          %s721 = ssub.s32 32, 32
          %722 = vsyncadd %s712, %s721
          %s723 = smul.addr %s719, 16
          %s724 = scalar_lea.hbm %s5, %s723
          %s725 = sshll.u32 %s715, 4
          %s726 = int_to_ptr.vmem [resolvable:$true] %s725
          %731 = dma.vmem_to_hbm [thread:$0]  %s726, 32, %s724, %s712, 16, 16, 1
        $region56: #{tpu_custom_call.1} parent=39 // pred_fallthru
          _
      $region40: #{tpu_custom_call.1} parent=5 // pred_fallthru
        _
      %p732 = scmp.le.s32.totalorder 2, %s20
      // Predicated region
      $region57: #{tpu_custom_call.1} parent=5 // pred_check
        %p733 = pneg %p732
      $region58: #{tpu_custom_call.1} parent=5 // pred_check_branch
        %735 = sbr.rel (%p733) target = $region60
      $region59: #{tpu_custom_call.1} parent=5 // pred_region
        %s736 = ssub.s32 %s20, 2
        // Predicated region
        $region61: #{tpu_custom_call.1} parent=59 // pred_check
          %p737 = pneg %p164
        $region62: #{tpu_custom_call.1} parent=59 // pred_check_branch
          %739 = sbr.rel (%p737) target = $region64
        $region63: #{tpu_custom_call.1} parent=59 // pred_region
          %s740 = sand.u32 %s149, 1
          %s741 = scalar_lea.sflag [#allocation4], %s740
          %s742 = sand.u32 %s149, 1
          %s743 = smul.addr %s742, 2
          %s744 = scalar_lea.vmem [#allocation8], %s743
          %745 = dma.done %s741, 32
        $region64: #{tpu_custom_call.1} parent=59 // pred_fallthru
          _
      $region60: #{tpu_custom_call.1} parent=5 // pred_fallthru
        _
    $region6: #{tpu_custom_call.1} parent=1 // loop_footer
      %s24 = sadd.s32 1, %s20
    $region7: #{tpu_custom_call.1} parent=1 // loop_footer_branch
      %19 = sbr.rel target = $region3
    $region8: #{tpu_custom_call.1} parent=1 // loop_exit
      _
    %746 = vsyncpa [#allocation3], 1
    %s747 = scalar_lea.sflag [#allocation3], 1
    %748 = vsyncpa %s747, 1
    %749 = vsyncpa [#allocation6], 1
    %s750 = scalar_lea.sflag [#allocation6], 1
    %751 = vsyncpa %s750, 1
    %752 = vsyncpa [#allocation4], 1
    %s753 = scalar_lea.sflag [#allocation4], 1
    %754 = vsyncpa %s753, 1

</llo_original>
